<compile_context>
chip_gen: v6e
topology: v6e:2x2x1
jax: 0.10.0
libtpu: 0.0.40
codegen_flags: <defaults>
</compile_context>

<pallas_src>
import jax
import jax.numpy as jnp
from jax.experimental import pallas as pl
from jax.experimental.pallas import tpu as pltpu

INPUT_SIZE = 57
HIDDEN_SIZE = 50
OUTPUT_SIZE = 9
N_PAD = 128  # lane-dense packed width: [hidden(50) | logits(9) | zero pad]


# ----------------------------------------------------------------------------
# Kernel: one time-block (TT steps) per grid iteration, hidden in VMEM scratch.
# ----------------------------------------------------------------------------
def _char_rnn_seq_kernel(xproj_ref, h0_ref, w_h_ref, out_ref, h_scr):
    """xproj_ref: (TT, BB, 128)  precomputed x @ [W1.T|W2.T|0] + b  (streamed)
    h0_ref   : (BB, 128)         initial hidden, zero-padded       (resident)
    w_h_ref  : (128, 128)        fused hidden-part weights, zero-padded rows
    out_ref  : (TT, BB, 128)     packed [hidden(50) | log_softmax(9) | 0]
    h_scr    : (BB, 128) f32     hidden carried across time blocks (scratch)
    """
    # Re-initialize the hidden carry at the start of each batch block's sweep.
    @pl.when(pl.program_id(1) == 0)
    def _():
        h_scr[...] = h0_ref[...].astype(jnp.float32)

    tt = xproj_ref.shape[0]
    bb = h_scr.shape[0]

    # Hoisted out of the serial loop: lane mask + resident weight load.
    col = jax.lax.broadcasted_iota(jnp.int32, (bb, N_PAD), 1)
    is_logit = jnp.logical_and(col >= HIDDEN_SIZE,
                               col < HIDDEN_SIZE + OUTPUT_SIZE)
    w_h = w_h_ref[...]

    def step(t, h):
        # Serial critical path: one small MXU push + adds per step.
        acc = xproj_ref[t] + jnp.dot(h.astype(w_h.dtype), w_h,
                                     preferred_element_type=jnp.float32)
        # Numerically-stable log-softmax over the 9 logit lanes (masked).
        masked = jnp.where(is_logit, acc, jnp.float32(-1e30))
        m = jnp.max(masked, axis=1, keepdims=True)
        shifted = masked - m
        lse = jnp.log(jnp.sum(jnp.exp(shifted), axis=1, keepdims=True))
        # Lanes >=50 of the carry are harmless (W_h rows >=50 are zero), so
        # acc is stored directly (no extra select). Packed lane-dense output.
        out_ref[t] = jnp.where(is_logit, shifted - lse, acc)
        return acc

    h_final = jax.lax.fori_loop(0, tt, step, h_scr[...])
    h_scr[...] = h_final


# ----------------------------------------------------------------------------
# One-time parameter packing (hoisted out of the per-call / per-step path).
# ----------------------------------------------------------------------------
def prepare_params(w1, b1, w2, b2):
    """Fuse W1/W2 column-wise, split into input/hidden row blocks, pad lane-dense."""
    n = HIDDEN_SIZE + OUTPUT_SIZE                                   # 59
    w_full = jnp.concatenate([w1.T, w2.T], axis=1)                  # (107, 59)
    w_full = jnp.pad(w_full, ((0, 0), (0, N_PAD - n)))              # (107, 128)
    w_x = w_full[:INPUT_SIZE]                                       # (57, 128)
    w_h = jnp.pad(w_full[INPUT_SIZE:],
                  ((0, N_PAD - HIDDEN_SIZE), (0, 0)))               # (128, 128)
    b = jnp.pad(jnp.concatenate([b1, b2]),
                (0, N_PAD - n)).reshape(1, N_PAD)                   # (1, 128)
    return w_x, w_h, b


# ----------------------------------------------------------------------------
# Wrappers.
# ----------------------------------------------------------------------------
def char_rnn_classify_sequence(xs, h0, prepared, *, time_block=64,
                               batch_block=None, matmul_dtype=jnp.float32,
                               vmem_limit_bytes=None):
    """Run the full T-step recurrence with time-blocked grid iterations.

    xs: (T, B, 57) inputs, h0: (B, 50) initial hidden.
    Returns (log_probs (T, B, 9), hiddens (T, B, 50)).
    """
    w_x, w_h, b = prepared
    T, B, _ = xs.shape
    if batch_block is None:
        batch_block = B
    assert B % batch_block == 0, "B must divide into batch blocks"
    assert batch_block % 8 == 0, "batch block must be sublane-aligned (mult of 8)"

    # --- Hoisted, time-parallel input projection: ONE big GEMM (M = T*B). ---
    xproj = jnp.dot(xs.reshape(T * B, INPUT_SIZE).astype(matmul_dtype),
                    w_x.astype(matmul_dtype),
                    preferred_element_type=jnp.float32) + b          # (T*B, 128)
    xproj = xproj.reshape(T, B, N_PAD)

    tt = max(1, min(time_block, T))
    nt = pl.cdiv(T, tt)
    T_pad = nt * tt
    if T_pad != T:
        xproj = jnp.pad(xproj, ((0, T_pad - T), (0, 0), (0, 0)))

    h0_pad = jnp.pad(h0.astype(jnp.float32),
                     ((0, 0), (0, N_PAD - HIDDEN_SIZE)))              # (B, 128)
    w_h_mm = w_h.astype(matmul_dtype)
    nb = B // batch_block

    packed = pl.pallas_call(
        _char_rnn_seq_kernel,
        out_shape=jax.ShapeDtypeStruct((T_pad, B, N_PAD), jnp.float32),
        grid_spec=pltpu.PrefetchScalarGridSpec(
            num_scalar_prefetch=0,
            grid=(nb, nt),
            in_specs=[
                pl.BlockSpec((tt, batch_block, N_PAD),
                             lambda bb, t: (t, bb, 0)),               # xproj (streamed)
                pl.BlockSpec((batch_block, N_PAD),
                             lambda bb, t: (bb, 0)),                  # h0 (per batch blk)
                pl.BlockSpec((N_PAD, N_PAD), lambda bb, t: (0, 0)),   # W_h (resident)
            ],
            out_specs=pl.BlockSpec((tt, batch_block, N_PAD),
                                   lambda bb, t: (t, bb, 0)),
            scratch_shapes=[pltpu.VMEM((batch_block, N_PAD), jnp.float32)],
        ),
        compiler_params=pltpu.CompilerParams(
            dimension_semantics=("parallel", "arbitrary"),  # batch || , time serial
            vmem_limit_bytes=vmem_limit_bytes),
    )(xproj, h0_pad, w_h_mm)

    hiddens = packed[:T, :, :HIDDEN_SIZE]
    log_probs = packed[:T, :, HIDDEN_SIZE:HIDDEN_SIZE + OUTPUT_SIZE]
    return log_probs, hiddens


def char_rnn_classify_forward(x, hidden, prepared, *, matmul_dtype=jnp.float32):
    """Exact PyTorch module semantics for one step: returns (output, new_hidden)."""
    log_probs, hiddens = char_rnn_classify_sequence(
        x[None], hidden, prepared, time_block=1, matmul_dtype=matmul_dtype)
    return log_probs[0], hiddens[0]


# ----------------------------------------------------------------------------
# Parameter init (matches nn.Linear default: uniform +-1/sqrt(fan_in)).
# ----------------------------------------------------------------------------
def init_params(key):
    f = INPUT_SIZE + HIDDEN_SIZE
    k1, k2, k3, k4 = jax.random.split(key, 4)
    bound = 1.0 / jnp.sqrt(jnp.float32(f))
    w1 = jax.random.uniform(k1, (HIDDEN_SIZE, f), jnp.float32, -bound, bound)
    b1 = jax.random.uniform(k2, (HIDDEN_SIZE,), jnp.float32, -bound, bound)
    w2 = jax.random.uniform(k3, (OUTPUT_SIZE, f), jnp.float32, -bound, bound)
    b2 = jax.random.uniform(k4, (OUTPUT_SIZE,), jnp.float32, -bound, bound)
    return w1, b1, w2, b2


# ----------------------------------------------------------------------------
# Pure-JAX references.
# ----------------------------------------------------------------------------
def _ref_step(x, h, params):
    w1, b1, w2, b2 = params
    combined = jnp.concatenate([x, h], axis=1)
    new_h = combined @ w1.T + b1
    logits = combined @ w2.T + b2
    return jax.nn.log_softmax(logits, axis=1), new_h


def _ref_sequence(xs, h0, params):
    outs, hs = [], []
    h = h0
    for t in range(xs.shape[0]):
        o, h = _ref_step(xs[t], h, params)
        outs.append(o)
        hs.append(h)
    return jnp.stack(outs), jnp.stack(hs)


if __name__ == "__main__":
    key = jax.random.PRNGKey(0)
    k_param, k_x = jax.random.split(key, 2)

    params = init_params(k_param)
    prepared = prepare_params(*params)          # one-time fuse / pad / transpose

    B, T = 8, 16                                # small, sublane-aligned batch
    xs = jax.random.normal(k_x, (T, B, INPUT_SIZE), jnp.float32)
    h0 = jnp.zeros((B, HIDDEN_SIZE), jnp.float32)   # init_hidden() broadcast to batch

    # --- single step: exact PyTorch forward semantics ---
    out0, h1 = char_rnn_classify_forward(xs[0], h0, prepared)
    jax.block_until_ready((out0, h1))
    ref_out0, ref_h1 = _ref_step(xs[0], h0, params)
    assert jnp.allclose(out0, ref_out0, atol=1e-4, rtol=1e-4), "step log-softmax mismatch"
    assert jnp.allclose(h1, ref_h1, atol=1e-4, rtol=1e-4), "step hidden mismatch"

    # --- full sequence, time-blocked (exercises hidden carry across blocks) ---
    log_probs, hiddens = char_rnn_classify_sequence(xs, h0, prepared, time_block=4)
    jax.block_until_ready((log_probs, hiddens))
    ref_lp, ref_hs = _ref_sequence(xs, h0, params)
    assert jnp.allclose(log_probs, ref_lp, atol=1e-3, rtol=1e-3), "seq log-softmax mismatch"
    assert jnp.allclose(hiddens, ref_hs, atol=1e-3, rtol=1e-3), "seq hidden mismatch"

    # --- default (single time block covering all of T) ---
    lp_d, hs_d = char_rnn_classify_sequence(xs, h0, prepared)
    jax.block_until_ready((lp_d, hs_d))
    assert jnp.allclose(lp_d, ref_lp, atol=1e-3, rtol=1e-3), "default seq mismatch"

    # --- bf16-operand variant (recommended on v6e / v7x; f32 accumulation) ---
    lp_bf16, hs_bf16 = char_rnn_classify_sequence(
        xs, h0, prepared, time_block=4, matmul_dtype=jnp.bfloat16)
    jax.block_until_ready((lp_bf16, hs_bf16))
    assert bool(jnp.all(jnp.isfinite(lp_bf16))) and bool(jnp.all(jnp.isfinite(hs_bf16)))
    assert jnp.allclose(lp_bf16, ref_lp, atol=1.0, rtol=0.2), "bf16 path grossly wrong"

    print("KERNEL_OK")
</pallas_src>

<mosaic_0001>
module attributes {stable_mosaic.version = 11 : i64} {
  func.func @_char_rnn_seq_kernel(%arg0: i32, %arg1: i32, %arg2: memref<1x8x128xf32, #tpu.memory_space<vmem>>, %arg3: memref<8x128xf32, #tpu.memory_space<vmem>>, %arg4: memref<128x128xf32, #tpu.memory_space<vmem>>, %arg5: memref<1x8x128xf32, #tpu.memory_space<vmem>>, %arg6: memref<8x128xf32, #tpu.memory_space<vmem>>) attributes {dimension_semantics = [#tpu.dimension_semantics<parallel>, #tpu.dimension_semantics<arbitrary>], iteration_bounds = array<i64: 1, 1>, scalar_prefetch = 0 : i64, scratch_operands = 1 : i64, tpu.core_type = #tpu.core_type<tc>, window_params = [{transform_indices = @transform_0, window_bounds = array<i64: 1, 8, 128>}, {transform_indices = @transform_1, window_bounds = array<i64: 8, 128>}, {pipeline_mode = #tpu.pipeline_mode<synchronous>, transform_indices = @transform_2, window_bounds = array<i64: 128, 128>}, {transform_indices = @transform_3, window_bounds = array<i64: 1, 8, 128>}]} {
    %c0_i32 = arith.constant 0 : i32
    %0 = arith.cmpi eq, %arg1, %c0_i32 : i32
    %1 = arith.extui %0 : i1 to i32
    %c0_i32_0 = arith.constant 0 : i32
    %2 = arith.cmpi ne, %1, %c0_i32_0 : i32
    scf.if %2 {
      %c0_14 = arith.constant 0 : index
      %c0_15 = arith.constant 0 : index
      %34 = vector.load %arg3[%c0_14, %c0_15] : memref<8x128xf32, #tpu.memory_space<vmem>>, vector<8x128xf32>
      %c0_16 = arith.constant 0 : index
      %c0_17 = arith.constant 0 : index
      %35 = vector.load %arg6[%c0_16, %c0_17] : memref<8x128xf32, #tpu.memory_space<vmem>>, vector<8x128xf32>
      tpu.vector_store %arg6[%c0_16, %c0_17], %34 {strides = array<i32>} : memref<8x128xf32, #tpu.memory_space<vmem>>, vector<8x128xf32>,
    } else {
    }
    %3 = tpu.iota {dimensions = array<i32: 1>} : vector<8x128xi32>
    %c50_i32 = arith.constant 50 : i32
    %4 = vector.broadcast %c50_i32 : i32 to vector<8x128xi32>
    %5 = arith.cmpi sge, %3, %4 : vector<8x128xi32>
    %c59_i32 = arith.constant 59 : i32
    %6 = vector.broadcast %c59_i32 : i32 to vector<8x128xi32>
    %7 = arith.cmpi slt, %3, %6 : vector<8x128xi32>
    %8 = arith.andi %5, %7 : vector<8x128xi1>
    %c0 = arith.constant 0 : index
    %c0_1 = arith.constant 0 : index
    %9 = vector.load %arg4[%c0, %c0_1] : memref<128x128xf32, #tpu.memory_space<vmem>>, vector<128x128xf32>
    %c0_2 = arith.constant 0 : index
    %c0_3 = arith.constant 0 : index
    %10 = vector.load %arg6[%c0_2, %c0_3] : memref<8x128xf32, #tpu.memory_space<vmem>>, vector<8x128xf32>
    %c0_i32_4 = arith.constant 0 : i32
    %11 = arith.index_cast %c0_i32_4 : i32 to index
    %c0_5 = arith.constant 0 : index
    %c0_6 = arith.constant 0 : index
    %12 = vector.load %arg2[%11, %c0_5, %c0_6] : memref<1x8x128xf32, #tpu.memory_space<vmem>>, vector<1x8x128xf32>
    %13 = vector.shape_cast %12 : vector<1x8x128xf32> to vector<8x128xf32>
    %cst = arith.constant dense<0.000000e+00> : vector<8x128xf32>
    %14 = tpu.matmul %10, %9, %cst {dimension_numbers = #tpu.dot_dimension_numbers<[1], [0], [0], [1], [0, 0, 1, 1], [], []>} : vector<8x128xf32>, vector<128x128xf32>, vector<8x128xf32> -> vector<8x128xf32>
    %15 = arith.addf %13, %14 : vector<8x128xf32>
    %cst_7 = arith.constant -1.000000e+30 : f32
    %16 = vector.broadcast %cst_7 : f32 to vector<8x128xf32>
    %17 = arith.select %8, %15, %16 : vector<8x128xi1>, vector<8x128xf32>
    %cst_8 = arith.constant dense<0xFF800000> : vector<8xf32>
    %18 = vector.multi_reduction <maximumf>, %17, %cst_8 [1] : vector<8x128xf32> to vector<8xf32>
    %19 = vector.shape_cast %18 : vector<8xf32> to vector<8x1xf32>
    %20 = vector.broadcast %19 : vector<8x1xf32> to vector<8x128xf32>
    %21 = arith.subf %17, %20 : vector<8x128xf32>
    %22 = math.exp %21 : vector<8x128xf32>
    %cst_9 = arith.constant dense<0.000000e+00> : vector<8xf32>
    %23 = vector.multi_reduction <add>, %22, %cst_9 [1] : vector<8x128xf32> to vector<8xf32>
    %24 = vector.shape_cast %23 : vector<8xf32> to vector<8x1xf32>
    %25 = math.log %24 : vector<8x1xf32>
    %26 = vector.broadcast %25 : vector<8x1xf32> to vector<8x128xf32>
    %27 = arith.subf %21, %26 : vector<8x128xf32>
    %28 = arith.select %8, %27, %15 : vector<8x128xi1>, vector<8x128xf32>
    %29 = arith.index_cast %c0_i32_4 : i32 to index
    %c0_10 = arith.constant 0 : index
    %c0_11 = arith.constant 0 : index
    %30 = vector.load %arg5[%29, %c0_10, %c0_11] : memref<1x8x128xf32, #tpu.memory_space<vmem>>, vector<1x8x128xf32>
    %31 = vector.shape_cast %30 : vector<1x8x128xf32> to vector<8x128xf32>
    %32 = vector.shape_cast %28 : vector<8x128xf32> to vector<1x8x128xf32>
    tpu.vector_store %arg5[%29, %c0_10, %c0_11], %32 {strides = array<i32>} : memref<1x8x128xf32, #tpu.memory_space<vmem>>, vector<1x8x128xf32>,
    %c1_i32 = arith.constant 1 : i32
    %c0_12 = arith.constant 0 : index
    %c0_13 = arith.constant 0 : index
    %33 = vector.load %arg6[%c0_12, %c0_13] : memref<8x128xf32, #tpu.memory_space<vmem>>, vector<8x128xf32>
    tpu.vector_store %arg6[%c0_12, %c0_13], %15 {strides = array<i32>} : memref<8x128xf32, #tpu.memory_space<vmem>>, vector<8x128xf32>,
    return
  }
  func.func @transform_0(%arg0: i32, %arg1: i32) -> (i32, i32, i32) {
    %c0_i32 = arith.constant 0 : i32
    %c0_i32_0 = arith.constant 0 : i32
    return %arg1, %arg0, %c0_i32 : i32, i32, i32
  }
  func.func @transform_1(%arg0: i32, %arg1: i32) -> (i32, i32) {
    %c0_i32 = arith.constant 0 : i32
    %c0_i32_0 = arith.constant 0 : i32
    return %arg0, %c0_i32 : i32, i32
  }
  func.func @transform_2(%arg0: i32, %arg1: i32) -> (i32, i32) {
    %c0_i32 = arith.constant 0 : i32
    %c0_i32_0 = arith.constant 0 : i32
    %c0_i32_1 = arith.constant 0 : i32
    return %c0_i32, %c0_i32_0 : i32, i32
  }
  func.func @transform_3(%arg0: i32, %arg1: i32) -> (i32, i32, i32) {
    %c0_i32 = arith.constant 0 : i32
    %c0_i32_0 = arith.constant 0 : i32
    return %arg1, %arg0, %c0_i32 : i32, i32, i32
  }
}

</mosaic_0001>

<llo_original>
// kernel: tpu_custom_call.1
$region0: #{tpu_custom_call.1}
  #allocation0 [shape = 'u32[]', space=smem, size = 0x4, offset = 0x4, fixed_abs, tag = 'smem constant byte address 0x4 - core index']
  #allocation1 [shape = 'u32[144,128]{1,0:T(1,128)}', space=vmem, size = 0x12000, scoped, tag = 'internal scratch']
  #allocation2 [shape = 'f32[8,128]{1,0:T(8,128)}', space=vmem, size = 0x1000, scoped, tag = 'scratch operand']
  %s0 = inlined_call_operand.hbm [shape: f32[1,8,128], index: 0, kind: input, shape index: {}]
  %s1 = inlined_call_operand.hbm [shape: f32[8,128], index: 1, kind: input, shape index: {}]
  %s2 = inlined_call_operand.hbm [shape: f32[128,128], index: 2, kind: input, shape index: {}]
  %s3 = inlined_call_operand.hbm [shape: f32[1,8,128], index: 3, kind: output, shape index: {}]
  %s4 = sld [smem:[#allocation0]]
  $region38: #{tpu_custom_call.1} parent=0
    _
  %s6 = ssub.s32 1, %s4
  %s7 = scalar_select 0, %s6, %s4
  $region1: #{tpu_custom_call.1} parent=0
    #allocation3 [shape = 'u8[4096]{0}', space=vmem, size = 0x1000, scoped, tag = 'input window, operand 0, single buffered']
    #allocation4 [shape = 's32[1]{0}', space=sflag, size = 0x4, scoped, tag = 'scoped memory for tpu_custom_call.1']
    #allocation5 [shape = 's32[1]{0}', space=sflag, size = 0x4, scoped, tag = 'scoped memory for tpu_custom_call.1']
    #allocation6 [shape = 'u8[4096]{0}', space=vmem, size = 0x1000, scoped, tag = 'input window, operand 1, single buffered']
    #allocation7 [shape = 's32[1]{0}', space=sflag, size = 0x4, scoped, tag = 'scoped memory for tpu_custom_call.1']
    #allocation8 [shape = 'u8[65536]{0}', space=vmem, size = 0x10000, scoped, tag = 'input window, operand 2, single buffered']
    #allocation9 [shape = 'u8[4096]{0}', space=vmem, size = 0x1000, scoped, tag = 'output window, operand 0, single buffered']
    %8 = vsyncpa [#allocation4], 0
    %9 = vsyncpa [#allocation7], 0
    %10 = vsyncpa [#allocation5], 0
    // Predicated region
    $region2: #{tpu_custom_call.1} parent=1 // pred_check
      _
    $region3: #{tpu_custom_call.1} parent=1 // pred_check_branch
      %12 = sbr.rel (0) target = $region5
    $region4: #{tpu_custom_call.1} parent=1 // pred_region
      %s14 = ssub.s32 128, 128
      %15 = vsyncadd [#allocation4], %s14
      %s17 = sshll.u32 [#allocation3], 4
      %s18 = int_to_ptr.vmem [resolvable:$true] %s17
      %20 = dma.hbm_to_vmem [thread:$0]  %s0, 128, %s18, [#allocation4]
    $region5: #{tpu_custom_call.1} parent=1 // pred_fallthru
      _
    // Predicated region
    $region6: #{tpu_custom_call.1} parent=1 // pred_check
      _
    $region7: #{tpu_custom_call.1} parent=1 // pred_check_branch
      %22 = sbr.rel (0) target = $region9
    $region8: #{tpu_custom_call.1} parent=1 // pred_region
      %s24 = ssub.s32 128, 128
      %25 = vsyncadd [#allocation7], %s24
      %s27 = sshll.u32 [#allocation6], 4
      %s28 = int_to_ptr.vmem [resolvable:$true] %s27
      %30 = dma.hbm_to_vmem [thread:$0]  %s1, 128, %s28, [#allocation7]
    $region9: #{tpu_custom_call.1} parent=1 // pred_fallthru
      _
    // Predicated region
    $region10: #{tpu_custom_call.1} parent=1 // pred_check
      _
    $region11: #{tpu_custom_call.1} parent=1 // pred_check_branch
      %32 = sbr.rel (0) target = $region13
    $region12: #{tpu_custom_call.1} parent=1 // pred_region
      %s34 = ssub.s32 2048, 2048
      %35 = vsyncadd [#allocation7], %s34
      %s36 = sshll.u32 [#allocation8], 4
      %s37 = int_to_ptr.vmem [resolvable:$true] %s36
      %42 = dma.hbm_to_vmem [thread:$0]  %s2, 2048, %s37, [#allocation7], 128, 128, 8
    $region13: #{tpu_custom_call.1} parent=1 // pred_fallthru
      _
    // Predicated region
    $region14: #{tpu_custom_call.1} parent=1 // pred_check
      _
    $region15: #{tpu_custom_call.1} parent=1 // pred_check_branch
      %44 = sbr.rel (0) target = $region17
    $region16: #{tpu_custom_call.1} parent=1 // pred_region
      %45 = dma.done [#allocation4], 128
    $region17: #{tpu_custom_call.1} parent=1 // pred_fallthru
      _
    // Predicated region
    $region18: #{tpu_custom_call.1} parent=1 // pred_check
      _
    $region19: #{tpu_custom_call.1} parent=1 // pred_check_branch
      %47 = sbr.rel (0) target = $region21
    $region20: #{tpu_custom_call.1} parent=1 // pred_region
      %48 = dma.done [#allocation7], 128
    $region21: #{tpu_custom_call.1} parent=1 // pred_fallthru
      _
    // Predicated region
    $region22: #{tpu_custom_call.1} parent=1 // pred_check
      _
    $region23: #{tpu_custom_call.1} parent=1 // pred_check_branch
      %50 = sbr.rel (0) target = $region25
    $region24: #{tpu_custom_call.1} parent=1 // pred_region
      %51 = dma.done [#allocation7], 2048
    $region25: #{tpu_custom_call.1} parent=1 // pred_fallthru
      _
    %p52 = scmp.eq.s32.totalorder 0, 0
    // Predicated region
    $region26: #{tpu_custom_call.1} parent=1 // pred_check
      %p53 = pneg %p52
    $region27: #{tpu_custom_call.1} parent=1 // pred_check_branch
      %55 = sbr.rel (%p53) target = $region29
    $region28: #{tpu_custom_call.1} parent=1 // pred_region
      %v56 = vld [vmem:[#allocation6] sm:$0xff]
      %57 = vst [vmem:[#allocation2] sm:$0xff] %v56
    $region29: #{tpu_custom_call.1} parent=1 // pred_fallthru
      _
    %v58 = vlaneseq
    %v59 = vand.u32 %v58, 127
    %vm60 = vcmp.ge.s32.totalorder %v59, 50
    %vm61 = vcmp.lt.s32.totalorder %v59, 59
    %vm62 = vmand %vm60, %vm61
    %v63 = vld [vmem:[#allocation8] sm:$0xff]
    %v64 = vld [vmem:[#allocation8 + $0x8] sm:$0xff]
    %v65 = vld [vmem:[#allocation8 + $0x10] sm:$0xff]
    %v66 = vld [vmem:[#allocation8 + $0x18] sm:$0xff]
    %v67 = vld [vmem:[#allocation8 + $0x20] sm:$0xff]
    %v68 = vld [vmem:[#allocation8 + $0x28] sm:$0xff]
    %v69 = vld [vmem:[#allocation8 + $0x30] sm:$0xff]
    %v70 = vld [vmem:[#allocation8 + $0x38] sm:$0xff]
    %v71 = vld [vmem:[#allocation8 + $0x40] sm:$0xff]
    %v72 = vld [vmem:[#allocation8 + $0x48] sm:$0xff]
    %v73 = vld [vmem:[#allocation8 + $0x50] sm:$0xff]
    %v74 = vld [vmem:[#allocation8 + $0x58] sm:$0xff]
    %v75 = vld [vmem:[#allocation8 + $0x60] sm:$0xff]
    %v76 = vld [vmem:[#allocation8 + $0x68] sm:$0xff]
    %v77 = vld [vmem:[#allocation8 + $0x70] sm:$0xff]
    %v78 = vld [vmem:[#allocation8 + $0x78] sm:$0xff]
    %v79 = vld [vmem:[#allocation2] sm:$0xff]
    %v80 = vld [vmem:[#allocation3] sm:$0xff]
    %81 = vmatprep.subr.mxu0 0.0
    %82 = vmatpush1.msra.mxu0 %v78
    %83 = vmatprep.subr.mxu0 0.0
    %84 = vmatpush1.msra.mxu0 %v77
    %85 = vmatprep.subr.mxu0 0.0
    %86 = vmatpush1.msra.mxu0 %v76
    %87 = vmatprep.subr.mxu0 0.0
    %88 = vmatpush1.msra.mxu0 %v75
    %89 = vmatprep.subr.mxu0 0.0
    %90 = vmatpush1.msra.mxu0 %v74
    %91 = vmatprep.subr.mxu0 0.0
    %92 = vmatpush1.msra.mxu0 %v73
    %93 = vmatprep.subr.mxu0 0.0
    %94 = vmatpush1.msra.mxu0 %v72
    %95 = vmatprep.subr.mxu0 0.0
    %96 = vmatpush1.msra.mxu0 %v71
    %97 = vmatprep.subr.mxu0 0.0
    %98 = vmatpush1.msra.mxu0 %v70
    %99 = vmatprep.subr.mxu0 0.0
    %100 = vmatpush1.msra.mxu0 %v69
    %101 = vmatprep.subr.mxu0 0.0
    %102 = vmatpush1.msra.mxu0 %v68
    %103 = vmatprep.subr.mxu0 0.0
    %104 = vmatpush1.msra.mxu0 %v67
    %105 = vmatprep.subr.mxu0 0.0
    %106 = vmatpush1.msra.mxu0 %v66
    %107 = vmatprep.subr.mxu0 0.0
    %108 = vmatpush1.msra.mxu0 %v65
    %109 = vmatprep.subr.mxu0 0.0
    %110 = vmatpush1.msra.mxu0 %v64
    %111 = vmatprep.subr.mxu0 0.0
    %112 = vmatpush1.msra.mxu0 %v63
    %113 = vmatprep.subr.mxu0 0.0
    %114 = vmatpush2.msra.mxu0 0.0
    %115 = vmatprep.subr.mxu0 0.0
    %116 = vmatpush2.msra.mxu0 0.0
    %117 = vmatprep.subr.mxu0 0.0
    %118 = vmatpush2.msra.mxu0 0.0
    %119 = vmatprep.subr.mxu0 0.0
    %120 = vmatpush2.msra.mxu0 0.0
    %121 = vmatprep.subr.mxu0 0.0
    %122 = vmatpush2.msra.mxu0 0.0
    %123 = vmatprep.subr.mxu0 0.0
    %124 = vmatpush2.msra.mxu0 0.0
    %125 = vmatprep.subr.mxu0 0.0
    %126 = vmatpush2.msra.mxu0 0.0
    %127 = vmatprep.subr.mxu0 0.0
    %128 = vmatpush2.msra.mxu0 0.0
    %129 = vmatprep.subr.mxu0 0.0
    %130 = vmatpush2.msra.mxu0 0.0
    %131 = vmatprep.subr.mxu0 0.0
    %132 = vmatpush2.msra.mxu0 0.0
    %133 = vmatprep.subr.mxu0 0.0
    %134 = vmatpush2.msra.mxu0 0.0
    %135 = vmatprep.subr.mxu0 0.0
    %136 = vmatpush2.msra.mxu0 0.0
    %137 = vmatprep.subr.mxu0 0.0
    %138 = vmatpush2.msra.mxu0 0.0
    %139 = vmatprep.subr.mxu0 0.0
    %140 = vmatpush2.msra.mxu0 0.0
    %141 = vmatprep.subr.mxu0 0.0
    %142 = vmatpush2.msra.mxu0 0.0
    %143 = vmatprep.subr.mxu0 0.0
    %144 = vmatpush2.msra.mxu0 0.0
    %145 = vmatprep.mubr.f32.mxu0 0.0
    %146 = vmatmul.mubr.f32.gmra.mxu0 %v79
    %v147 = vpop.f32.mrf.mxu0
    %v148 = vadd.f32 0.0, %v147
    %v149 = vpop.f32.mrf.mxu0
    %150 = vdwg.mxu0
    %v151 = vadd.f32 %v80, %v148
    %v152 = vsel %vm62, %v151, -1e+30
    %153 = vmax.xlane.f32.xlu0 %v152
    %v154 = vpop.xlane.xlu0 %153
    %v155 = vsub.f32 %v152, %v154
    %v156 = vmul.f32 %v155, 1.442695
    %v157 = vpow.pop %v156
    %158 = vadd.xlane.f32.xlu0 %v157
    %v159 = vpop.xlane.xlu0 %158
    %v160 = vlog2.pop %v159
    %v161 = vmul.f32 %v160, 0.6931472
    %v162 = vsub.f32 %v155, %v161
    %v163 = vsel %vm62, %v162, %v151
    %164 = vst [vmem:[#allocation9] sm:$0xff] %v163
    %165 = vst [vmem:[#allocation2] sm:$0xff] %v151
    // Predicated region
    $region30: #{tpu_custom_call.1} parent=1 // pred_check
      _
    $region31: #{tpu_custom_call.1} parent=1 // pred_check_branch
      %167 = sbr.rel (0) target = $region33
    $region32: #{tpu_custom_call.1} parent=1 // pred_region
      %s169 = ssub.s32 128, 128
      %170 = vsyncadd [#allocation5], %s169
      %s172 = sshll.u32 [#allocation9], 4
      %s173 = int_to_ptr.vmem [resolvable:$true] %s172
      %175 = dma.vmem_to_hbm [thread:$0]  %s173, 128, %s3, [#allocation5]
    $region33: #{tpu_custom_call.1} parent=1 // pred_fallthru
      _
    // Predicated region
    $region34: #{tpu_custom_call.1} parent=1 // pred_check
      _
    $region35: #{tpu_custom_call.1} parent=1 // pred_check_branch
      %177 = sbr.rel (0) target = $region37
    $region36: #{tpu_custom_call.1} parent=1 // pred_region
      %178 = dma.done [#allocation5], 128
    $region37: #{tpu_custom_call.1} parent=1 // pred_fallthru
      _
    %179 = vsyncpa [#allocation4], 1
    %180 = vsyncpa [#allocation7], 1
    %181 = vsyncpa [#allocation5], 1

</llo_original>
